<compile_context>
chip_gen: v5e
topology: v5e:2x2
jax: 0.10.0
libtpu: 0.0.40
codegen_flags: <defaults>
</compile_context>

<pallas_src>
import functools

import jax
import jax.numpy as jnp
from jax.experimental import pallas as pl
from jax.experimental.pallas import tpu as pltpu


def _round_up(n: int, m: int) -> int:
    return ((n + m - 1) // m) * m


def _choose_batch_tile(b_pad: int, sublane: int, cap: int = 1024) -> int:
    """Pick the batch tile TB.

    Prefers the largest multiple of `sublane` that (a) divides b_pad exactly
    (no padded batch rows / wasted DMA), (b) is <= cap, and (c) leaves >= 2
    grid steps so the "parallel" batch axis can shard across both v7x
    TensorCores.  Falls back to the whole (padded) batch as a single block.
    """
    best = None
    limit = min(cap, b_pad // 2)
    d = sublane
    while d <= limit:
        if b_pad % d == 0:
            best = d
        d += sublane
    return best if best is not None else b_pad


def _mlp_out(x_ref, w1_ref, b1_ref, w2_ref, b2_ref):
    """Shared fused body: relu(x @ W1 + b1) @ W2 + b2 with f32 accumulation."""
    # Cast the X tile to the compute dtype (bf16 by default) IN-KERNEL: the
    # HBM read stays f32-sized for f32 inputs, but the MXU runs at bf16 rate.
    x = x_ref[...].astype(w1_ref.dtype)
    h = jnp.dot(x, w1_ref[...], preferred_element_type=jnp.float32)
    h = jnp.maximum(h + b1_ref[...], 0.0)                 # f32 bias + ReLU
    out = jnp.dot(h.astype(w2_ref.dtype), w2_ref[...],
                  preferred_element_type=jnp.float32)
    return out + b2_ref[...]                               # f32 bias


def _mlp_logits_kernel(x_ref, w1_ref, b1_ref, w2_ref, b2_ref, logits_ref):
    out = _mlp_out(x_ref, w1_ref, b1_ref, w2_ref, b2_ref)
    logits_ref[...] = out.astype(logits_ref.dtype)


def _mlp_logits_classes_kernel(x_ref, w1_ref, b1_ref, w2_ref, b2_ref,
                               logits_ref, cls_ref):
    out = _mlp_out(x_ref, w1_ref, b1_ref, w2_ref, b2_ref)
    logits_ref[...] = out.astype(logits_ref.dtype)
    # Fused class threshold (int8: 4x fewer store bytes than int32).
    cls_ref[...] = (out > 0.0).astype(cls_ref.dtype)


@functools.partial(jax.jit, static_argnames=("emit_classes",))
def mlp_forward_pallas(x, w1_p, b1_p, w2_p, b2_p, *, emit_classes=False):
    """Fused MLP forward.

    Returns `logits` (f32) or, when emit_classes=True, `(logits, classes)`
    with classes = (logits > 0) as int8.  Weights are expected pre-padded
    (hidden dim -> multiple of 128) and pre-cast to the compute dtype.
    """
    B, D = x.shape
    Dw, H_pad = w1_p.shape
    H_pad2, C = w2_p.shape
    assert D == Dw and H_pad == H_pad2
    assert b1_p.shape == (1, H_pad) and b2_p.shape == (1, C)

    # Pad the batch only up to the f32 sublane multiple (8), and only when
    # needed (<= 7 extra rows); padded rows are sliced off at the end.
    B_pad = _round_up(B, 8)
    if B_pad != B:
        x = jnp.pad(x, ((0, B_pad - B), (0, 0)))

    # int8 classes want a 32-row tile; logits-only only needs 8.
    sublane = 32 if emit_classes else 8
    TB = _choose_batch_tile(B_pad, sublane, cap=1024)
    grid = (B_pad // TB,)

    x_spec = pl.BlockSpec((TB, D), lambda i: (i, 0))
    # Weights / biases: constant index_map -> DMA'd once, resident across the
    # whole batch grid.
    w1_spec = pl.BlockSpec((D, H_pad), lambda i: (0, 0))
    b1_spec = pl.BlockSpec((1, H_pad), lambda i: (0, 0))
    w2_spec = pl.BlockSpec((H_pad, C), lambda i: (0, 0))
    b2_spec = pl.BlockSpec((1, C), lambda i: (0, 0))
    in_specs = [x_spec, w1_spec, b1_spec, w2_spec, b2_spec]

    # Output feature dim kept at true C (full-dim block): for small C the
    # masked store writes far fewer bytes than a 128-padded lane-dense store
    # and no [:, :C] wrapper slice is needed.
    if emit_classes:
        kernel = _mlp_logits_classes_kernel
        out_shape = (jax.ShapeDtypeStruct((B_pad, C), jnp.float32),
                     jax.ShapeDtypeStruct((B_pad, C), jnp.int8))
        out_specs = (pl.BlockSpec((TB, C), lambda i: (i, 0)),
                     pl.BlockSpec((TB, C), lambda i: (i, 0)))
    else:
        kernel = _mlp_logits_kernel
        out_shape = jax.ShapeDtypeStruct((B_pad, C), jnp.float32)
        out_specs = pl.BlockSpec((TB, C), lambda i: (i, 0))

    # Scheduler hint so XLA overlaps surrounding ops with the kernel.
    flops = 2 * B_pad * (D * H_pad + H_pad * C)
    bytes_accessed = (
        x.size * x.dtype.itemsize
        + w1_p.size * w1_p.dtype.itemsize + b1_p.size * b1_p.dtype.itemsize
        + w2_p.size * w2_p.dtype.itemsize + b2_p.size * b2_p.dtype.itemsize
        + B_pad * C * 4 + (B_pad * C if emit_classes else 0))
    cost = pl.CostEstimate(flops=flops, transcendentals=0,
                           bytes_accessed=bytes_accessed)

    # Explicit VMEM budget (conservatively assume default double-buffering of
    # every block), raised above the default scoped limit with 2x headroom.
    wb = w1_p.dtype.itemsize
    vmem_est = (2 * TB * D * x.dtype.itemsize
                + 2 * D * H_pad * wb + 2 * H_pad * b1_p.dtype.itemsize
                + 2 * H_pad * C * wb + 2 * C * b2_p.dtype.itemsize
                + 2 * TB * C * 4 + (2 * TB * C if emit_classes else 0))
    vmem_limit = int(min(100 * 2**20, max(32 * 2**20, 2 * vmem_est)))

    result = pl.pallas_call(
        kernel,
        out_shape=out_shape,
        grid_spec=pl.GridSpec(grid=grid, in_specs=in_specs,
                              out_specs=out_specs),
        compiler_params=pltpu.CompilerParams(
            dimension_semantics=("parallel",),
            vmem_limit_bytes=vmem_limit),
        cost_estimate=cost,
    )(x, w1_p, b1_p, w2_p, b2_p)

    if emit_classes:
        logits, classes = result
        if B_pad != B:
            logits, classes = logits[:B], classes[:B]
        return logits, classes
    logits = result
    if B_pad != B:
        logits = logits[:B]
    return logits


class SetPredictionNNPallas:
    """JAX/Pallas counterpart of SetPredictionNN.

    forward(X) applies the wrapped model (here: the fused Pallas MLP, logits
    only).  predict_classes(X) uses the fused (logits, classes) kernel
    variant so the threshold never needs a second HBM round trip.
    """

    def __init__(self, in_features: int, hidden: int, num_outputs: int,
                 key=None, compute_dtype=jnp.bfloat16):
        if key is None:
            key = jax.random.PRNGKey(0)
        k1, k2, k3, k4 = jax.random.split(key, 4)
        # Deterministic synthetic parameter init (no checkpoint loading).
        w1 = (jax.random.normal(k1, (in_features, hidden), jnp.float32)
              * (1.0 / jnp.sqrt(in_features)))
        b1 = 0.01 * jax.random.normal(k2, (1, hidden), jnp.float32)
        w2 = (jax.random.normal(k3, (hidden, num_outputs), jnp.float32)
              * (1.0 / jnp.sqrt(hidden)))
        b2 = 0.01 * jax.random.normal(k4, (1, num_outputs), jnp.float32)

        # Pad the hidden (lane) dim to a multiple of 128 ONCE here and store
        # the matmul operands in the compute dtype so the per-call wrapper
        # does no padding / casting work on the parameters.  Zero padding is
        # exact: padded hidden columns are relu(0)=0 and the matching W2 rows
        # are 0.  Biases stay f32 (bias add / ReLU / threshold are f32).
        H_pad = _round_up(hidden, 128)
        self.w1 = jnp.pad(w1, ((0, 0), (0, H_pad - hidden))).astype(compute_dtype)
        self.b1 = jnp.pad(b1, ((0, 0), (0, H_pad - hidden)))
        self.w2 = jnp.pad(w2, ((0, H_pad - hidden), (0, 0))).astype(compute_dtype)
        self.b2 = b2
        self.compute_dtype = compute_dtype

    def forward(self, X: jnp.ndarray) -> jnp.ndarray:
        # Logits-only kernel: no classes writeback on the forward path.
        return mlp_forward_pallas(X, self.w1, self.b1, self.w2, self.b2,
                                  emit_classes=False)

    __call__ = forward

    def predict_proba(self, X):
        X = jnp.asarray(X, jnp.float32)
        return jax.device_get(self.forward(X))

    def _get_class_from_model_output(self, model_output: jnp.ndarray) -> jnp.ndarray:
        # Concrete realization of the abstract method: threshold logits at 0.
        return (model_output > 0.0).astype(jnp.int8)

    def predict_classes(self, X: jnp.ndarray, return_logits: bool = False):
        # Fused kernel variant: classes are computed in-kernel as int8
        # (callers needing int32 can upcast cheaply on their side).
        model_outputs, classes = mlp_forward_pallas(
            X, self.w1, self.b1, self.w2, self.b2, emit_classes=True)
        assert classes.ndim == model_outputs.ndim == 2
        assert classes.shape[0] == model_outputs.shape[0]
        assert classes.shape[1] == model_outputs.shape[1]
        if return_logits:
            return classes, model_outputs
        return classes


if __name__ == "__main__":
    key = jax.random.PRNGKey(0)
    kx, kp = jax.random.split(key)

    B, D, H, C = 8, 32, 64, 16
    X = jax.random.normal(kx, (B, D), jnp.float32)

    def ref_logits(model, X):
        cd = model.compute_dtype
        h = jnp.dot(X.astype(cd), model.w1,
                    preferred_element_type=jnp.float32) + model.b1
        h = jnp.maximum(h, 0.0)
        return jnp.dot(h.astype(cd), model.w2,
                       preferred_element_type=jnp.float32) + model.b2

    # Exact f32 path.
    m32 = SetPredictionNNPallas(D, H, C, key=kp, compute_dtype=jnp.float32)
    logits32 = m32(X)
    jax.block_until_ready(logits32)
    assert logits32.shape == (B, C) and logits32.dtype == jnp.float32
    assert jnp.allclose(logits32, ref_logits(m32, X), atol=1e-4, rtol=1e-4)

    # Default bf16-matmul path (f32 accumulation / bias / ReLU / threshold).
    m16 = SetPredictionNNPallas(D, H, C, key=kp)
    logits16 = m16(X)
    jax.block_until_ready(logits16)
    assert logits16.shape == (B, C)
    assert jnp.allclose(logits16, ref_logits(m16, X), atol=5e-2, rtol=5e-2)

    classes, out = m16.predict_classes(X, return_logits=True)
    jax.block_until_ready((classes, out))
    assert classes.shape == (B, C) and classes.dtype == jnp.int8
    assert out.shape == (B, C)
    assert jnp.array_equal(classes, (out > 0.0).astype(jnp.int8))
    assert jnp.allclose(out, logits16, atol=1e-5, rtol=1e-5)

    print("KERNEL_OK")
</pallas_src>

<mosaic_0001>
module attributes {stable_mosaic.version = 11 : i64} {
  func.func @_mlp_logits_kernel(%arg0: i32, %arg1: memref<8x32xf32, #tpu.memory_space<vmem>>, %arg2: memref<32x128xf32, #tpu.memory_space<vmem>>, %arg3: memref<1x128xf32, #tpu.memory_space<vmem>>, %arg4: memref<128x16xf32, #tpu.memory_space<vmem>>, %arg5: memref<1x16xf32, #tpu.memory_space<vmem>>, %arg6: memref<8x16xf32, #tpu.memory_space<vmem>>) attributes {dimension_semantics = [#tpu.dimension_semantics<parallel>], iteration_bounds = array<i64: 1>, scalar_prefetch = 0 : i64, scratch_operands = 0 : i64, tpu.core_type = #tpu.core_type<tc>, window_params = [{transform_indices = @transform_0, window_bounds = array<i64: 8, 32>}, {pipeline_mode = #tpu.pipeline_mode<synchronous>, transform_indices = @transform_1, window_bounds = array<i64: 32, 128>}, {pipeline_mode = #tpu.pipeline_mode<synchronous>, transform_indices = @transform_2, window_bounds = array<i64: 1, 128>}, {pipeline_mode = #tpu.pipeline_mode<synchronous>, transform_indices = @transform_3, window_bounds = array<i64: 128, 16>}, {pipeline_mode = #tpu.pipeline_mode<synchronous>, transform_indices = @transform_4, window_bounds = array<i64: 1, 16>}, {transform_indices = @transform_5, window_bounds = array<i64: 8, 16>}]} {
    %c0 = arith.constant 0 : index
    %c0_0 = arith.constant 0 : index
    %0 = vector.load %arg1[%c0, %c0_0] : memref<8x32xf32, #tpu.memory_space<vmem>>, vector<8x32xf32>
    %c0_1 = arith.constant 0 : index
    %c0_2 = arith.constant 0 : index
    %1 = vector.load %arg2[%c0_1, %c0_2] : memref<32x128xf32, #tpu.memory_space<vmem>>, vector<32x128xf32>
    %cst = arith.constant dense<0.000000e+00> : vector<8x128xf32>
    %2 = tpu.matmul %0, %1, %cst {dimension_numbers = #tpu.dot_dimension_numbers<[1], [0], [0], [1], [0, 0, 1, 1], [], []>} : vector<8x32xf32>, vector<32x128xf32>, vector<8x128xf32> -> vector<8x128xf32>
    %c0_3 = arith.constant 0 : index
    %c0_4 = arith.constant 0 : index
    %3 = vector.load %arg3[%c0_3, %c0_4] : memref<1x128xf32, #tpu.memory_space<vmem>>, vector<1x128xf32>
    %4 = vector.broadcast %3 : vector<1x128xf32> to vector<8x128xf32>
    %5 = arith.addf %2, %4 : vector<8x128xf32>
    %cst_5 = arith.constant 0.000000e+00 : f32
    %6 = vector.broadcast %cst_5 : f32 to vector<8x128xf32>
    %7 = arith.maximumf %5, %6 : vector<8x128xf32>
    %c0_6 = arith.constant 0 : index
    %c0_7 = arith.constant 0 : index
    %8 = vector.load %arg4[%c0_6, %c0_7] : memref<128x16xf32, #tpu.memory_space<vmem>>, vector<128x16xf32>
    %cst_8 = arith.constant dense<0.000000e+00> : vector<8x16xf32>
    %9 = tpu.matmul %7, %8, %cst_8 {dimension_numbers = #tpu.dot_dimension_numbers<[1], [0], [0], [1], [0, 0, 1, 1], [], []>} : vector<8x128xf32>, vector<128x16xf32>, vector<8x16xf32> -> vector<8x16xf32>
    %c0_9 = arith.constant 0 : index
    %c0_10 = arith.constant 0 : index
    %10 = vector.load %arg5[%c0_9, %c0_10] : memref<1x16xf32, #tpu.memory_space<vmem>>, vector<1x16xf32>
    %11 = vector.broadcast %10 : vector<1x16xf32> to vector<8x16xf32>
    %12 = arith.addf %9, %11 : vector<8x16xf32>
    %c0_11 = arith.constant 0 : index
    %c0_12 = arith.constant 0 : index
    %13 = vector.load %arg6[%c0_11, %c0_12] : memref<8x16xf32, #tpu.memory_space<vmem>>, vector<8x16xf32>
    tpu.vector_store %arg6[%c0_11, %c0_12], %12 {strides = array<i32>} : memref<8x16xf32, #tpu.memory_space<vmem>>, vector<8x16xf32>,
    return
  }
  func.func @transform_0(%arg0: i32) -> (i32, i32) {
    %c0_i32 = arith.constant 0 : i32
    %c0_i32_0 = arith.constant 0 : i32
    return %arg0, %c0_i32 : i32, i32
  }
  func.func @transform_1(%arg0: i32) -> (i32, i32) {
    %c0_i32 = arith.constant 0 : i32
    %c0_i32_0 = arith.constant 0 : i32
    %c0_i32_1 = arith.constant 0 : i32
    return %c0_i32, %c0_i32_0 : i32, i32
  }
  func.func @transform_2(%arg0: i32) -> (i32, i32) {
    %c0_i32 = arith.constant 0 : i32
    %c0_i32_0 = arith.constant 0 : i32
    %c0_i32_1 = arith.constant 0 : i32
    return %c0_i32, %c0_i32_0 : i32, i32
  }
  func.func @transform_3(%arg0: i32) -> (i32, i32) {
    %c0_i32 = arith.constant 0 : i32
    %c0_i32_0 = arith.constant 0 : i32
    %c0_i32_1 = arith.constant 0 : i32
    return %c0_i32, %c0_i32_0 : i32, i32
  }
  func.func @transform_4(%arg0: i32) -> (i32, i32) {
    %c0_i32 = arith.constant 0 : i32
    %c0_i32_0 = arith.constant 0 : i32
    %c0_i32_1 = arith.constant 0 : i32
    return %c0_i32, %c0_i32_0 : i32, i32
  }
  func.func @transform_5(%arg0: i32) -> (i32, i32) {
    %c0_i32 = arith.constant 0 : i32
    %c0_i32_0 = arith.constant 0 : i32
    return %arg0, %c0_i32 : i32, i32
  }
}

</mosaic_0001>

<llo_original>
// kernel: mlp_forward_pallas.1
$region0: #{mlp_forward_pallas.1}
  #allocation0 [shape = 'u32[]', space=smem, size = 0x4, offset = 0x4, fixed_abs, tag = 'smem constant byte address 0x4 - core index']
  #allocation1 [shape = 'u32[72,128]{1,0:T(1,128)}', space=vmem, size = 0x9000, scoped, tag = 'internal scratch']
  %s0 = inlined_call_operand.vmem [shape: f32[8,32], index: 0, kind: input, shape index: {}]
  %s1 = inlined_call_operand.vmem [shape: f32[32,128], index: 1, kind: input, shape index: {}]
  %s2 = inlined_call_operand.vmem [shape: f32[1,128], index: 2, kind: input, shape index: {}]
  %s3 = inlined_call_operand.vmem [shape: f32[128,16], index: 3, kind: input, shape index: {}]
  %s4 = inlined_call_operand.vmem [shape: f32[1,16], index: 4, kind: input, shape index: {}]
  %s5 = inlined_call_operand.hbm [shape: f32[8,16], index: 5, kind: output, shape index: {}]
  %s6 = sld [smem:[#allocation0]]
  $region30: #{mlp_forward_pallas.1} parent=0
    _
  %s8 = ssub.s32 1, %s6
  %s9 = scalar_select 0, %s8, %s6
  $region1: #{mlp_forward_pallas.1} parent=0
    #allocation2 [shape = 'u8[4096]{0}', space=vmem, size = 0x1000, scoped, tag = 'output window, operand 0, single buffered']
    #allocation3 [shape = 's32[1]{0}', space=sflag, size = 0x4, scoped, tag = 'scoped memory for mlp_forward_pallas.1']
    %10 = vsyncpa [#allocation3], 0
    // Predicated region
    $region2: #{mlp_forward_pallas.1} parent=1 // pred_check
      _
    $region3: #{mlp_forward_pallas.1} parent=1 // pred_check_branch
      %12 = sbr.rel (0) target = $region5
    $region4: #{mlp_forward_pallas.1} parent=1 // pred_region
      _
    $region5: #{mlp_forward_pallas.1} parent=1 // pred_fallthru
      _
    // Predicated region
    $region6: #{mlp_forward_pallas.1} parent=1 // pred_check
      _
    $region7: #{mlp_forward_pallas.1} parent=1 // pred_check_branch
      %14 = sbr.rel (0) target = $region9
    $region8: #{mlp_forward_pallas.1} parent=1 // pred_region
      _
    $region9: #{mlp_forward_pallas.1} parent=1 // pred_fallthru
      _
    // Predicated region
    $region10: #{mlp_forward_pallas.1} parent=1 // pred_check
      _
    $region11: #{mlp_forward_pallas.1} parent=1 // pred_check_branch
      %16 = sbr.rel (0) target = $region13
    $region12: #{mlp_forward_pallas.1} parent=1 // pred_region
      _
    $region13: #{mlp_forward_pallas.1} parent=1 // pred_fallthru
      _
    // Predicated region
    $region14: #{mlp_forward_pallas.1} parent=1 // pred_check
      _
    $region15: #{mlp_forward_pallas.1} parent=1 // pred_check_branch
      %18 = sbr.rel (0) target = $region17
    $region16: #{mlp_forward_pallas.1} parent=1 // pred_region
      _
    $region17: #{mlp_forward_pallas.1} parent=1 // pred_fallthru
      _
    // Predicated region
    $region18: #{mlp_forward_pallas.1} parent=1 // pred_check
      _
    $region19: #{mlp_forward_pallas.1} parent=1 // pred_check_branch
      %20 = sbr.rel (0) target = $region21
    $region20: #{mlp_forward_pallas.1} parent=1 // pred_region
      _
    $region21: #{mlp_forward_pallas.1} parent=1 // pred_fallthru
      _
    %v21 = vld [vmem:[%s0] sm:$0xff]
    %v22 = vld [vmem:[%s1] sm:$0xff]
    %v23 = vld [vmem:[%s1 + $0x8] sm:$0xff]
    %v24 = vld [vmem:[%s1 + $0x10] sm:$0xff]
    %v25 = vld [vmem:[%s1 + $0x18] sm:$0xff]
    %v26 = vld [vmem:[%s2] sm:$0x1]
    %v28 = vperm.slane %v26, 0
    %vm30 = vcmask 261120
    %v32 = vsel %vm30, %v21, 0
    %34 = vmatpush.msra.mxu0 0.0
    %35 = vmatpush.msra.mxu0 0.0
    %36 = vmatpush.msra.mxu0 0.0
    %37 = vmatpush.msra.mxu0 0.0
    %38 = vmatpush.msra.mxu0 0.0
    %39 = vmatpush.msra.mxu0 0.0
    %40 = vmatpush.msra.mxu0 0.0
    %41 = vmatpush.msra.mxu0 0.0
    %42 = vmatpush.msra.mxu0 0.0
    %43 = vmatpush.msra.mxu0 0.0
    %44 = vmatpush.msra.mxu0 0.0
    %45 = vmatpush.msra.mxu0 0.0
    %46 = vmatpush.msra.mxu0 %v25
    %47 = vmatpush.msra.mxu0 %v24
    %48 = vmatpush.msra.mxu0 %v23
    %49 = vmatpush.msra.mxu0 %v22
    %50 = vmatmul.f32.gmra.mxu0 %v32
    %v51 = vpop.f32.mrf.mxu0
    %v52 = vadd.f32 %v28, %v51
    %53 = vdwg.mxu0
    %v54 = vmax.f32 %v52, 0.0
    %v55 = vld [vmem:[%s3] sm:$0xff]
    %v56 = vld [vmem:[%s3 + $0x8] sm:$0xff]
    %v57 = vld [vmem:[%s3 + $0x10] sm:$0xff]
    %v58 = vld [vmem:[%s3 + $0x18] sm:$0xff]
    %v59 = vld [vmem:[%s3 + $0x20] sm:$0xff]
    %v60 = vld [vmem:[%s3 + $0x28] sm:$0xff]
    %v61 = vld [vmem:[%s3 + $0x30] sm:$0xff]
    %v62 = vld [vmem:[%s3 + $0x38] sm:$0xff]
    %v63 = vld [vmem:[%s3 + $0x40] sm:$0xff]
    %v64 = vld [vmem:[%s3 + $0x48] sm:$0xff]
    %v65 = vld [vmem:[%s3 + $0x50] sm:$0xff]
    %v66 = vld [vmem:[%s3 + $0x58] sm:$0xff]
    %v67 = vld [vmem:[%s3 + $0x60] sm:$0xff]
    %v68 = vld [vmem:[%s3 + $0x68] sm:$0xff]
    %v69 = vld [vmem:[%s3 + $0x70] sm:$0xff]
    %v70 = vld [vmem:[%s3 + $0x78] sm:$0xff]
    %v71 = vld [vmem:[%s4] sm:$0x1]
    %v73 = vperm.slane %v71, 0
    %75 = vmatpush.msra.mxu0 %v70
    %76 = vmatpush.msra.mxu0 %v69
    %77 = vmatpush.msra.mxu0 %v68
    %78 = vmatpush.msra.mxu0 %v67
    %79 = vmatpush.msra.mxu0 %v66
    %80 = vmatpush.msra.mxu0 %v65
    %81 = vmatpush.msra.mxu0 %v64
    %82 = vmatpush.msra.mxu0 %v63
    %83 = vmatpush.msra.mxu0 %v62
    %84 = vmatpush.msra.mxu0 %v61
    %85 = vmatpush.msra.mxu0 %v60
    %86 = vmatpush.msra.mxu0 %v59
    %87 = vmatpush.msra.mxu0 %v58
    %88 = vmatpush.msra.mxu0 %v57
    %89 = vmatpush.msra.mxu0 %v56
    %90 = vmatpush.msra.mxu0 %v55
    %91 = vmatmul.f32.gmra.mxu0 %v54
    %v92 = vpop.f32.mrf.mxu0
    %v93 = vadd.f32 %v73, %v92
    %94 = vdwg.mxu0
    %vm95 = vcmask 130048
    %96 = vst.msk [vmem:[#allocation2] sm:$0xff] %vm95, %v93
    // Predicated region
    $region22: #{mlp_forward_pallas.1} parent=1 // pred_check
      _
    $region23: #{mlp_forward_pallas.1} parent=1 // pred_check_branch
      %98 = sbr.rel (0) target = $region25
    $region24: #{mlp_forward_pallas.1} parent=1 // pred_region
      %100 = vsyncadd [#allocation3], 0
      %s102 = sshll.u32 [#allocation2], 4
      %s103 = int_to_ptr.vmem [resolvable:$true] %s102
      %s104 = sshll.u32 %s5, 4
      %s105 = int_to_ptr.hbm [resolvable:$true] %s104
      %107 = dma.vmem_to_hbm [thread:$0]  %s103, 128, %s105, [#allocation3]
    $region25: #{mlp_forward_pallas.1} parent=1 // pred_fallthru
      _
    // Predicated region
    $region26: #{mlp_forward_pallas.1} parent=1 // pred_check
      _
    $region27: #{mlp_forward_pallas.1} parent=1 // pred_check_branch
      %109 = sbr.rel (0) target = $region29
    $region28: #{mlp_forward_pallas.1} parent=1 // pred_region
      %111 = dma.done [#allocation3], 128
    $region29: #{mlp_forward_pallas.1} parent=1 // pred_fallthru
      _
    %112 = vsyncpa [#allocation3], 1

</llo_original>
